<compile_context>
chip_gen: v7x
topology: tpu7x:2x2x1
jax: 0.10.0
libtpu: 0.0.40
codegen_flags: <defaults>
</compile_context>

<pallas_src>
import functools

import numpy as np
import jax
import jax.numpy as jnp
from jax.experimental import pallas as pl
from jax.experimental.pallas import tpu as pltpu


def _vmem_limit_bytes():
    # Generation-aware VMEM budget: ~75% of physical VMEM (v5e/v6e: 128 MiB,
    # v7x: 64 MiB), capped at 100 MiB; safe fallback if the query is unavailable.
    try:
        cap = int(pltpu.get_tpu_info().vmem_capacity_bytes)
        return int(min(cap * 3 // 4, 100 * 1024 * 1024))
    except Exception:
        return 48 * 1024 * 1024


def _scale_kernel(x_ref, s_ref, o_ref):
    # o = weight * x ; s_ref is a per-row (per (n, c)) scale column that
    # broadcasts across the lane-dense spatial axis inside VMEM.
    o_ref[...] = (x_ref[...] * s_ref[...]).astype(o_ref.dtype)


def _pick_row_tile(rows, row_bytes, vmem_limit):
    if rows <= 512:
        return rows                      # single block == full dim (always legal)
    # x-in + out, double-buffered -> ~4 activation tiles live; leave 2x headroom.
    budget = max(vmem_limit // 8, 1)
    tm = min(512, max(8, budget // max(row_bytes, 1)))
    return max(8, (tm // 8) * 8)         # sublane-aligned (divisible by 8)


def scale_module_forward(x, weight):
    """Pallas TPU forward of _ScaleModule: out = weight * x.

    x:      (N, C, H, W) NCHW activation (as in PyTorch).
    weight: the _ScaleModule parameter of shape `dims`; in WTConv this is
            (1, C, 1, 1) (per-channel) or a scalar. Any shape broadcastable
            against x along the channel axis only is supported.
    """
    N, C, H, W = x.shape
    w = jnp.asarray(weight, dtype=jnp.float32).reshape(-1)
    if w.size == 1:
        w_c = jnp.broadcast_to(w, (C,))
    elif w.size == C:
        w_c = w
    else:
        # TODO(synk): fully general `dims` broadcasting (e.g. spatially varying
        # scale) is not used by WTConv's _ScaleModule; only scalar / per-channel.
        raise NotImplementedError("Only scalar or per-channel scale supported.")

    rows, hw = N * C, H * W
    x2 = x.reshape(rows, hw)                                   # free reshape (contiguous NCHW)
    s_rows = jnp.broadcast_to(w_c[None, :], (N, C)).reshape(rows, 1)  # tiny per-row column

    vmem_limit = _vmem_limit_bytes()
    tm = _pick_row_tile(rows, hw * x2.dtype.itemsize, vmem_limit)
    grid = (pl.cdiv(rows, tm),)

    out = pl.pallas_call(
        _scale_kernel,
        out_shape=jax.ShapeDtypeStruct((rows, hw), x.dtype),
        grid=grid,
        in_specs=[
            pl.BlockSpec((tm, hw), lambda i: (i, 0)),          # lane-dense activation tile
            pl.BlockSpec((tm, 1), lambda i: (i, 0)),           # per-row scale column
        ],
        out_specs=pl.BlockSpec((tm, hw), lambda i: (i, 0)),
        compiler_params=pltpu.CompilerParams(
            dimension_semantics=("parallel",),
            vmem_limit_bytes=vmem_limit,
        ),
    )(x2, s_rows)
    return out.reshape(N, C, H, W)


if __name__ == "__main__":
    key = jax.random.PRNGKey(0)
    kx, kw = jax.random.split(key)
    N, C, H, W = 2, 32, 16, 16
    x = jax.random.normal(kx, (N, C, H, W), jnp.float32)       # NCHW, like PyTorch
    # _ScaleModule([1, C, 1, 1], init_scale=0.1): weight = 0.1 * ones; perturb it
    # deterministically so the per-channel broadcast is actually exercised.
    weight = (0.1 * jnp.ones((1, C, 1, 1), jnp.float32)
              + 0.01 * jax.random.normal(kw, (1, C, 1, 1), jnp.float32))

    fwd = jax.jit(scale_module_forward)
    out = jax.block_until_ready(fwd(x, weight))

    ref = weight * x                                           # torch.mul(weight, x) semantics
    assert out.shape == ref.shape and out.dtype == ref.dtype
    assert bool(jnp.all(jnp.isfinite(out)))
    np.testing.assert_allclose(np.asarray(out), np.asarray(ref), rtol=1e-6, atol=1e-6)
    print("KERNEL_OK")
</pallas_src>

<mosaic_0001>
module attributes {stable_mosaic.version = 11 : i64} {
  func.func @_scale_kernel(%arg0: i32, %arg1: memref<64x256xf32, #tpu.memory_space<vmem>>, %arg2: memref<64x1xf32, #tpu.memory_space<vmem>>, %arg3: memref<64x256xf32, #tpu.memory_space<vmem>>) attributes {dimension_semantics = [#tpu.dimension_semantics<parallel>], iteration_bounds = array<i64: 1>, scalar_prefetch = 0 : i64, scratch_operands = 0 : i64, tpu.core_type = #tpu.core_type<tc>, window_params = [{transform_indices = @transform_0, window_bounds = array<i64: 64, 256>}, {transform_indices = @transform_1, window_bounds = array<i64: 64, 1>}, {transform_indices = @transform_2, window_bounds = array<i64: 64, 256>}]} {
    %c0 = arith.constant 0 : index
    %c0_0 = arith.constant 0 : index
    %0 = vector.load %arg1[%c0, %c0_0] : memref<64x256xf32, #tpu.memory_space<vmem>>, vector<64x256xf32>
    %c0_1 = arith.constant 0 : index
    %c0_2 = arith.constant 0 : index
    %1 = vector.load %arg2[%c0_1, %c0_2] : memref<64x1xf32, #tpu.memory_space<vmem>>, vector<64x1xf32>
    %2 = vector.broadcast %1 : vector<64x1xf32> to vector<64x256xf32>
    %3 = arith.mulf %0, %2 : vector<64x256xf32>
    %c0_3 = arith.constant 0 : index
    %c0_4 = arith.constant 0 : index
    %4 = vector.load %arg3[%c0_3, %c0_4] : memref<64x256xf32, #tpu.memory_space<vmem>>, vector<64x256xf32>
    tpu.vector_store %arg3[%c0_3, %c0_4], %3 {strides = array<i32>} : memref<64x256xf32, #tpu.memory_space<vmem>>, vector<64x256xf32>,
    return
  }
  func.func @transform_0(%arg0: i32) -> (i32, i32) {
    %c0_i32 = arith.constant 0 : i32
    %c0_i32_0 = arith.constant 0 : i32
    return %arg0, %c0_i32 : i32, i32
  }
  func.func @transform_1(%arg0: i32) -> (i32, i32) {
    %c0_i32 = arith.constant 0 : i32
    %c0_i32_0 = arith.constant 0 : i32
    return %arg0, %c0_i32 : i32, i32
  }
  func.func @transform_2(%arg0: i32) -> (i32, i32) {
    %c0_i32 = arith.constant 0 : i32
    %c0_i32_0 = arith.constant 0 : i32
    return %arg0, %c0_i32 : i32, i32
  }
}

</mosaic_0001>

<llo_original>
// kernel: scale_module_forward.1
$region0: #{scale_module_forward.1}
  #allocation0 [shape = 'u32[]', space=smem, size = 0x4, offset = 0x4, fixed_abs, tag = 'smem constant byte address 0x4 - core index']
  #allocation1 [shape = 'u32[144,128]{1,0:T(1,128)}', space=vmem, size = 0x12000, scoped, tag = 'internal scratch']
  %s0 = inlined_call_operand.vmem [shape: f32[64,256], index: 0, kind: input, shape index: {}]
  %s1 = inlined_call_operand.vmem [shape: f32[64,1], index: 1, kind: input, shape index: {}]
  %s2 = inlined_call_operand.vmem [shape: f32[64,256], index: 2, kind: output, shape index: {}]
  %s3 = sld [smem:[#allocation0]]
  $region18: #{scale_module_forward.1} parent=0
    _
  %s5 = ssub.s32 1, %s3
  %s6 = scalar_select 0, %s5, %s3
  // Predicated region
  $region2: #{scale_module_forward.1} parent=0 // pred_check
    _
  $region3: #{scale_module_forward.1} parent=0 // pred_check_branch
    %8 = sbr.rel (0) target = $region5
  $region4: #{scale_module_forward.1} parent=0 // pred_region
    _
  $region5: #{scale_module_forward.1} parent=0 // pred_fallthru
    _
  // Predicated region
  $region6: #{scale_module_forward.1} parent=0 // pred_check
    _
  $region7: #{scale_module_forward.1} parent=0 // pred_check_branch
    %10 = sbr.rel (0) target = $region9
  $region8: #{scale_module_forward.1} parent=0 // pred_region
    _
  $region9: #{scale_module_forward.1} parent=0 // pred_fallthru
    _
  %v11 = vld [vmem:[%s0] sm:$0xff]
  %v12 = vld [vmem:[%s0 + $0x8] sm:$0xff]
  %v13 = vld [vmem:[%s0 + $0x10] sm:$0xff]
  %v14 = vld [vmem:[%s0 + $0x18] sm:$0xff]
  %v15 = vld [vmem:[%s0 + $0x20] sm:$0xff]
  %v16 = vld [vmem:[%s0 + $0x28] sm:$0xff]
  %v17 = vld [vmem:[%s0 + $0x30] sm:$0xff]
  %v18 = vld [vmem:[%s0 + $0x38] sm:$0xff]
  %v19 = vld [vmem:[%s0 + $0x40] sm:$0xff]
  %v20 = vld [vmem:[%s0 + $0x48] sm:$0xff]
  %v21 = vld [vmem:[%s0 + $0x50] sm:$0xff]
  %v22 = vld [vmem:[%s0 + $0x58] sm:$0xff]
  %v23 = vld [vmem:[%s0 + $0x60] sm:$0xff]
  %v24 = vld [vmem:[%s0 + $0x68] sm:$0xff]
  %v25 = vld [vmem:[%s0 + $0x70] sm:$0xff]
  %v26 = vld [vmem:[%s0 + $0x78] sm:$0xff]
  %v27 = vld [vmem:[%s1] sm:$0xff]
  %v28 = vld [vmem:[%s1 + $0x8] sm:$0xff]
  %v29 = vld [vmem:[%s1 + $0x10] sm:$0xff]
  %v30 = vld [vmem:[%s1 + $0x18] sm:$0xff]
  %v31 = vld [vmem:[%s1 + $0x20] sm:$0xff]
  %v32 = vld [vmem:[%s1 + $0x28] sm:$0xff]
  %v33 = vld [vmem:[%s1 + $0x30] sm:$0xff]
  %v34 = vld [vmem:[%s1 + $0x38] sm:$0xff]
  %36 = vset.pattern.permute.xlu0 0
  %37 = vperm.xlu0 %36, %v27
  %v38 = vpop.permute.xlu0 %37
  %41 = vset.pattern.permute.xlu0 0
  %42 = vperm.xlu0 %41, %v28
  %v43 = vpop.permute.xlu0 %42
  %46 = vset.pattern.permute.xlu0 0
  %47 = vperm.xlu0 %46, %v29
  %v48 = vpop.permute.xlu0 %47
  %51 = vset.pattern.permute.xlu0 0
  %52 = vperm.xlu0 %51, %v30
  %v53 = vpop.permute.xlu0 %52
  %56 = vset.pattern.permute.xlu0 0
  %57 = vperm.xlu0 %56, %v31
  %v58 = vpop.permute.xlu0 %57
  %61 = vset.pattern.permute.xlu0 0
  %62 = vperm.xlu0 %61, %v32
  %v63 = vpop.permute.xlu0 %62
  %66 = vset.pattern.permute.xlu0 0
  %67 = vperm.xlu0 %66, %v33
  %v68 = vpop.permute.xlu0 %67
  %71 = vset.pattern.permute.xlu0 0
  %72 = vperm.xlu0 %71, %v34
  %v73 = vpop.permute.xlu0 %72
  %v75 = vmul.f32 %v11, %v38
  %v76 = vmul.f32 %v12, %v38
  %v77 = vmul.f32 %v13, %v43
  %v78 = vmul.f32 %v14, %v43
  %v79 = vmul.f32 %v15, %v48
  %v80 = vmul.f32 %v16, %v48
  %v81 = vmul.f32 %v17, %v53
  %v82 = vmul.f32 %v18, %v53
  %v83 = vmul.f32 %v19, %v58
  %v84 = vmul.f32 %v20, %v58
  %v85 = vmul.f32 %v21, %v63
  %v86 = vmul.f32 %v22, %v63
  %v87 = vmul.f32 %v23, %v68
  %v88 = vmul.f32 %v24, %v68
  %v89 = vmul.f32 %v25, %v73
  %v90 = vmul.f32 %v26, %v73
  %91 = vst [vmem:[%s2] sm:$0xff] %v75
  %92 = vst [vmem:[%s2 + $0x8] sm:$0xff] %v76
  %93 = vst [vmem:[%s2 + $0x10] sm:$0xff] %v77
  %94 = vst [vmem:[%s2 + $0x18] sm:$0xff] %v78
  %95 = vst [vmem:[%s2 + $0x20] sm:$0xff] %v79
  %96 = vst [vmem:[%s2 + $0x28] sm:$0xff] %v80
  %97 = vst [vmem:[%s2 + $0x30] sm:$0xff] %v81
  %98 = vst [vmem:[%s2 + $0x38] sm:$0xff] %v82
  %99 = vst [vmem:[%s2 + $0x40] sm:$0xff] %v83
  %100 = vst [vmem:[%s2 + $0x48] sm:$0xff] %v84
  %101 = vst [vmem:[%s2 + $0x50] sm:$0xff] %v85
  %102 = vst [vmem:[%s2 + $0x58] sm:$0xff] %v86
  %103 = vst [vmem:[%s2 + $0x60] sm:$0xff] %v87
  %104 = vst [vmem:[%s2 + $0x68] sm:$0xff] %v88
  %105 = vst [vmem:[%s2 + $0x70] sm:$0xff] %v89
  %106 = vst [vmem:[%s2 + $0x78] sm:$0xff] %v90
  // Predicated region
  $region10: #{scale_module_forward.1} parent=0 // pred_check
    _
  $region11: #{scale_module_forward.1} parent=0 // pred_check_branch
    %108 = sbr.rel (0) target = $region13
  $region12: #{scale_module_forward.1} parent=0 // pred_region
    _
  $region13: #{scale_module_forward.1} parent=0 // pred_fallthru
    _
  // Predicated region
  $region14: #{scale_module_forward.1} parent=0 // pred_check
    _
  $region15: #{scale_module_forward.1} parent=0 // pred_check_branch
    %110 = sbr.rel (0) target = $region17
  $region16: #{scale_module_forward.1} parent=0 // pred_region
    _
  $region17: #{scale_module_forward.1} parent=0 // pred_fallthru
    _

</llo_original>
